<compile_context>
chip_gen: v7x
topology: tpu7x:2x2x1
jax: 0.10.0
libtpu: 0.0.40
codegen_flags: <defaults>
</compile_context>

<pallas_src>
import jax
import jax.numpy as jnp
import numpy as np
from jax.experimental import pallas as pl
from jax.experimental.pallas import tpu as pltpu


# ----------------------------------------------------------------------------
# Kernel: one grid step == L pixels of one batch element (lane-dense).
# ----------------------------------------------------------------------------
def _cross_attn_kernel(xs_ref, kb_ref, v_ref, wq_ref, wo_ref, b_ref, ys_ref):
    xs = xs_ref[0]                                    # (2*Cq, L)  rows = [re | im]

    # ---- to_q : complex 1x1 conv as ONE real matmul (scale folded in) -------
    # wq_big = [[Wq_r^T, -Wq_i^T], [Wq_i^T, Wq_r^T]] * scale
    q = jnp.dot(wq_ref[...], xs, preferred_element_type=jnp.float32)   # (2*inner, L)

    # ---- scores = (q @ k^T) * scale : one (2, 2*inner) block-diag(k) matmul --
    s = jnp.dot(kb_ref[0], q, preferred_element_type=jnp.float32)      # (2, L)
    sr = s[0:1, :]                                    # (1, L) real score
    si = s[1:2, :]                                    # (1, L) imag score

    # ---- ComplexSoftmax over the (length-1) kv sequence axis -----------------
    mag = jnp.exp(sr)
    er = mag * jnp.cos(si)
    ei = mag * jnp.sin(si)
    dr = er                                           # sum over length-1 sequence
    di = ei
    den = dr * dr + di * di
    ar = (er * dr + ei * di) / den                    # (1, L) attn real (== 1)
    ai = (ei * dr - er * di) / den                    # (1, L) attn imag (== 0)

    # ---- out = attn * v  (v real)  ->  stacked (2*inner, L) ------------------
    v = v_ref[0]                                      # (inner, 1)
    out = jnp.concatenate([v * ar, v * ai], axis=0)   # (2*inner, L)

    # ---- to_out : complex 1x1 conv + bias ; ComplexDropout = identity (eval) -
    ys_ref[0] = jnp.dot(wo_ref[...], out,
                        preferred_element_type=jnp.float32) + b_ref[...]


def _pick_lane_block(hw, batch, target=8192):
    """Lanes per grid step: divisor of H*W, multiple of 128 (or H*W itself)."""
    if hw <= target and batch >= 2:
        return hw
    limit = min(hw, target)
    for d in range(limit - limit % 128, 0, -128):
        if hw % d == 0 and batch * (hw // d) >= 2:
            return d
    return hw


# ----------------------------------------------------------------------------
# Wrapper: layout glue + pallas_call
# ----------------------------------------------------------------------------
def complex_chunked_value_cross_attn(x, context, params, *, heads, dim_head,
                                     chunk_size, lane_block_target=8192):
    """x: complex64 [B, Cq, H, W], context: f32 [B, Cctx] -> complex64 [B, Cq, H, W]."""
    B, Cq, H, W = x.shape
    cs = chunk_size
    assert H % cs == 0 and W % cs == 0, f"Dimensions must be divisible by {cs}"
    inner = heads * dim_head
    scale = dim_head ** -0.5
    HW = H * W
    f32 = jnp.float32

    wqr, wqi, wk, wv, wor, woi, bor, boi = params

    # ---- hoisted context projections (tiny, once per batch element) ---------
    ctx = context.astype(f32)
    k = jnp.dot(ctx, wk)                                   # (B, inner)
    v = jnp.dot(ctx, wv)                                   # (B, inner)
    zeros = jnp.zeros_like(k)
    k_big = jnp.stack([jnp.concatenate([k, zeros], axis=1),
                       jnp.concatenate([zeros, k], axis=1)], axis=1)  # (B, 2, 2*inner)
    v_col = v[:, :, None]                                  # (B, inner, 1)

    # ---- stacked real weights for the complex 1x1 convs (scale folded) ------
    wq_big = jnp.concatenate(
        [jnp.concatenate([wqr.T, -wqi.T], axis=1),
         jnp.concatenate([wqi.T,  wqr.T], axis=1)], axis=0) * scale   # (2*inner, 2*Cq)
    wo_big = jnp.concatenate(
        [jnp.concatenate([wor.T, -woi.T], axis=1),
         jnp.concatenate([woi.T,  wor.T], axis=1)], axis=0)           # (2*Cq, 2*inner)
    b_col = jnp.concatenate([bor.reshape(Cq, 1), boi.reshape(Cq, 1)], axis=0)  # (2*Cq, 1)

    # ---- lane-dense pixel layout: (B, 2*Cq, H*W), real rows then imag rows ---
    xs = jnp.concatenate([jnp.real(x), jnp.imag(x)], axis=1).astype(f32)
    xs = xs.reshape(B, 2 * Cq, HW)

    L = _pick_lane_block(HW, B, lane_block_target)
    n_g = HW // L

    def _replicated(arr):
        nd = arr.ndim
        return pl.BlockSpec(arr.shape, lambda b, j, _n=nd: (0,) * _n)

    ys = pl.pallas_call(
        _cross_attn_kernel,
        out_shape=jax.ShapeDtypeStruct((B, 2 * Cq, HW), f32),
        grid_spec=pltpu.PrefetchScalarGridSpec(
            num_scalar_prefetch=0,
            grid=(B, n_g),
            in_specs=[
                pl.BlockSpec((1, 2 * Cq, L), lambda b, j: (b, 0, j)),       # x (re|im)
                pl.BlockSpec((1, 2, 2 * inner), lambda b, j: (b, 0, 0)),    # block-diag(k)
                pl.BlockSpec((1, inner, 1), lambda b, j: (b, 0, 0)),        # v column
                _replicated(wq_big),
                _replicated(wo_big),
                _replicated(b_col),
            ],
            out_specs=pl.BlockSpec((1, 2 * Cq, L), lambda b, j: (b, 0, j)),
        ),
        compiler_params=pltpu.CompilerParams(
            dimension_semantics=("parallel", "parallel")),
    )(xs, k_big, v_col, wq_big, wo_big, b_col)

    ys = ys.reshape(B, 2, Cq, H, W)
    return jax.lax.complex(ys[:, 0], ys[:, 1]).astype(jnp.complex64)


# ----------------------------------------------------------------------------
# Deterministic parameter init (shapes match the PyTorch module's __init__)
# ----------------------------------------------------------------------------
def init_params(key, query_dim, context_dim, heads, dim_head):
    inner = heads * dim_head
    ks = jax.random.split(key, 8)

    def xavier(k, shape, fan_in, fan_out):
        a = (6.0 / (fan_in + fan_out)) ** 0.5
        return jax.random.uniform(k, shape, jnp.float32, -a, a)

    # to_q : Conv2d(query_dim -> inner, 1x1, bias=False, complex) ; stored (Cq, inner)
    wq_r = xavier(ks[0], (query_dim, inner), query_dim, inner)
    wq_i = xavier(ks[1], (query_dim, inner), query_dim, inner)
    # to_k / to_v : Linear(context_dim -> inner, bias=False) ; stored (Cctx, inner)
    wk = xavier(ks[2], (context_dim, inner), context_dim, inner)
    wv = xavier(ks[3], (context_dim, inner), context_dim, inner)
    # to_out[0] : Conv2d(inner -> query_dim, 1x1, complex, bias=True) ; stored (inner, Cq)
    wo_r = xavier(ks[4], (inner, query_dim), inner, query_dim)
    wo_i = xavier(ks[5], (inner, query_dim), inner, query_dim)
    b = 1.0 / (inner ** 0.5)
    bo_r = jax.random.uniform(ks[6], (1, query_dim), jnp.float32, -b, b)
    bo_i = jax.random.uniform(ks[7], (1, query_dim), jnp.float32, -b, b)
    return (wq_r, wq_i, wk, wv, wo_r, wo_i, bo_r, bo_i)


# ----------------------------------------------------------------------------
# Pure-numpy reference (mirrors the PyTorch forward semantics, chunked form)
# ----------------------------------------------------------------------------
def reference_numpy(x, context, params, heads, dim_head, chunk_size):
    wqr, wqi, wk, wv, wor, woi, bor, boi = params
    Wq = (wqr + 1j * wqi).astype(np.complex64)
    Wo = (wor + 1j * woi).astype(np.complex64)
    bo = (bor + 1j * boi).astype(np.complex64)
    B, Cq, H, W = x.shape
    cs = chunk_size
    nh, nw = H // cs, W // cs
    nblk, P = B * nh * nw, cs * cs
    scale = dim_head ** -0.5

    xp = (x.reshape(B, Cq, nh, cs, nw, cs)
            .transpose(0, 2, 4, 3, 5, 1)
            .reshape(nblk, P, Cq))
    q = xp @ Wq                                           # (nblk, P, inner)
    ctx = np.repeat(context, nh * nw, axis=0)[:, None, :]  # (nblk, 1, Cctx)
    k = ctx @ wk                                          # (nblk, 1, inner)
    v = ctx @ wv
    scores = (q @ np.transpose(k, (0, 2, 1)).astype(q.dtype)) * scale   # (nblk, P, 1)
    e = np.exp(scores)
    attn = e / np.sum(e, axis=-1, keepdims=True)          # ComplexSoftmax
    out = attn @ v.astype(attn.dtype)                     # (nblk, P, inner)
    y = out @ Wo + bo                                     # (nblk, P, Cq)
    y = (y.reshape(B, nh, nw, cs, cs, Cq)
           .transpose(0, 5, 1, 3, 2, 4)
           .reshape(B, Cq, H, W))
    return y.astype(np.complex64)


if __name__ == "__main__":
    key = jax.random.PRNGKey(0)
    B, Cq, H, W = 2, 4, 16, 16
    Cctx, heads, dim_head, cs = 16, 8, 4, 8   # inner_dim = 32, chunk = 8x8

    k1, k2, k3, kp = jax.random.split(key, 4)
    x = (jax.random.normal(k1, (B, Cq, H, W), jnp.float32)
         + 1j * jax.random.normal(k2, (B, Cq, H, W), jnp.float32)).astype(jnp.complex64)
    context = jax.random.normal(k3, (B, Cctx), jnp.float32)
    params = init_params(kp, Cq, Cctx, heads, dim_head)

    def run(xx, cc, pp):
        return complex_chunked_value_cross_attn(
            xx, cc, pp, heads=heads, dim_head=dim_head, chunk_size=cs)

    y = jax.block_until_ready(jax.jit(run)(x, context, params))

    y_ref = reference_numpy(np.asarray(x), np.asarray(context),
                            [np.asarray(p) for p in params],
                            heads, dim_head, cs)
    np.testing.assert_allclose(np.asarray(y), y_ref, rtol=2e-3, atol=2e-3)
    print("KERNEL_OK")
</pallas_src>

<mosaic_0001>
module attributes {stable_mosaic.version = 11 : i64} {
  func.func @_cross_attn_kernel(%arg0: i32, %arg1: i32, %arg2: memref<1x8x256xf32, #tpu.memory_space<vmem>>, %arg3: memref<1x2x64xf32, #tpu.memory_space<vmem>>, %arg4: memref<1x32x1xf32, #tpu.memory_space<vmem>>, %arg5: memref<64x8xf32, #tpu.memory_space<vmem>>, %arg6: memref<8x64xf32, #tpu.memory_space<vmem>>, %arg7: memref<8x1xf32, #tpu.memory_space<vmem>>, %arg8: memref<1x8x256xf32, #tpu.memory_space<vmem>>) attributes {dimension_semantics = [#tpu.dimension_semantics<parallel>, #tpu.dimension_semantics<parallel>], iteration_bounds = array<i64: 2, 1>, scalar_prefetch = 0 : i64, scratch_operands = 0 : i64, tpu.core_type = #tpu.core_type<tc>, window_params = [{transform_indices = @transform_0, window_bounds = array<i64: 1, 8, 256>}, {transform_indices = @transform_1, window_bounds = array<i64: 1, 2, 64>}, {transform_indices = @transform_2, window_bounds = array<i64: 1, 32, 1>}, {pipeline_mode = #tpu.pipeline_mode<synchronous>, transform_indices = @transform_3, window_bounds = array<i64: 64, 8>}, {pipeline_mode = #tpu.pipeline_mode<synchronous>, transform_indices = @transform_4, window_bounds = array<i64: 8, 64>}, {pipeline_mode = #tpu.pipeline_mode<synchronous>, transform_indices = @transform_5, window_bounds = array<i64: 8, 1>}, {transform_indices = @transform_6, window_bounds = array<i64: 1, 8, 256>}]} {
    %c0 = arith.constant 0 : index
    %c0_0 = arith.constant 0 : index
    %c0_1 = arith.constant 0 : index
    %0 = vector.load %arg2[%c0, %c0_0, %c0_1] : memref<1x8x256xf32, #tpu.memory_space<vmem>>, vector<1x8x256xf32>
    %1 = vector.shape_cast %0 : vector<1x8x256xf32> to vector<8x256xf32>
    %c0_2 = arith.constant 0 : index
    %c0_3 = arith.constant 0 : index
    %2 = vector.load %arg5[%c0_2, %c0_3] : memref<64x8xf32, #tpu.memory_space<vmem>>, vector<64x8xf32>
    %cst = arith.constant dense<0.000000e+00> : vector<64x256xf32>
    %3 = tpu.matmul %2, %1, %cst {dimension_numbers = #tpu.dot_dimension_numbers<[1], [0], [0], [1], [0, 0, 1, 1], [], []>} : vector<64x8xf32>, vector<8x256xf32>, vector<64x256xf32> -> vector<64x256xf32>
    %c0_4 = arith.constant 0 : index
    %c0_5 = arith.constant 0 : index
    %c0_6 = arith.constant 0 : index
    %4 = vector.load %arg3[%c0_4, %c0_5, %c0_6] : memref<1x2x64xf32, #tpu.memory_space<vmem>>, vector<1x2x64xf32>
    %5 = vector.shape_cast %4 : vector<1x2x64xf32> to vector<2x64xf32>
    %cst_7 = arith.constant dense<0.000000e+00> : vector<2x256xf32>
    %6 = tpu.matmul %5, %3, %cst_7 {dimension_numbers = #tpu.dot_dimension_numbers<[1], [0], [0], [1], [0, 0, 1, 1], [], []>} : vector<2x64xf32>, vector<64x256xf32>, vector<2x256xf32> -> vector<2x256xf32>
    %7 = vector.extract_strided_slice %6 {offsets = [0, 0], sizes = [1, 256], strides = [1, 1]} : vector<2x256xf32> to vector<1x256xf32>
    %8 = vector.extract_strided_slice %6 {offsets = [1, 0], sizes = [1, 256], strides = [1, 1]} : vector<2x256xf32> to vector<1x256xf32>
    %9 = math.exp %7 : vector<1x256xf32>
    %10 = math.cos %8 : vector<1x256xf32>
    %11 = arith.mulf %9, %10 : vector<1x256xf32>
    %12 = math.sin %8 : vector<1x256xf32>
    %13 = arith.mulf %9, %12 : vector<1x256xf32>
    %14 = arith.mulf %11, %11 : vector<1x256xf32>
    %15 = arith.mulf %13, %13 : vector<1x256xf32>
    %16 = arith.addf %14, %15 : vector<1x256xf32>
    %17 = arith.mulf %11, %11 : vector<1x256xf32>
    %18 = arith.mulf %13, %13 : vector<1x256xf32>
    %19 = arith.addf %17, %18 : vector<1x256xf32>
    %20 = arith.divf %19, %16 : vector<1x256xf32>
    %21 = arith.mulf %13, %11 : vector<1x256xf32>
    %22 = arith.mulf %11, %13 : vector<1x256xf32>
    %23 = arith.subf %21, %22 : vector<1x256xf32>
    %24 = arith.divf %23, %16 : vector<1x256xf32>
    %c0_8 = arith.constant 0 : index
    %c0_9 = arith.constant 0 : index
    %c0_10 = arith.constant 0 : index
    %25 = vector.load %arg4[%c0_8, %c0_9, %c0_10] : memref<1x32x1xf32, #tpu.memory_space<vmem>>, vector<1x32x1xf32>
    %26 = vector.shape_cast %25 : vector<1x32x1xf32> to vector<32x1xf32>
    %27 = vector.broadcast %26 : vector<32x1xf32> to vector<32x256xf32>
    %28 = vector.broadcast %20 : vector<1x256xf32> to vector<32x256xf32>
    %29 = arith.mulf %27, %28 : vector<32x256xf32>
    %30 = vector.broadcast %26 : vector<32x1xf32> to vector<32x256xf32>
    %31 = vector.broadcast %24 : vector<1x256xf32> to vector<32x256xf32>
    %32 = arith.mulf %30, %31 : vector<32x256xf32>
    %33 = tpu.concatenate %29, %32 in 0 : vector<32x256xf32>, vector<32x256xf32> -> vector<64x256xf32>
    %c0_11 = arith.constant 0 : index
    %c0_12 = arith.constant 0 : index
    %34 = vector.load %arg6[%c0_11, %c0_12] : memref<8x64xf32, #tpu.memory_space<vmem>>, vector<8x64xf32>
    %cst_13 = arith.constant dense<0.000000e+00> : vector<8x256xf32>
    %35 = tpu.matmul %34, %33, %cst_13 {dimension_numbers = #tpu.dot_dimension_numbers<[1], [0], [0], [1], [0, 0, 1, 1], [], []>} : vector<8x64xf32>, vector<64x256xf32>, vector<8x256xf32> -> vector<8x256xf32>
    %c0_14 = arith.constant 0 : index
    %c0_15 = arith.constant 0 : index
    %36 = vector.load %arg7[%c0_14, %c0_15] : memref<8x1xf32, #tpu.memory_space<vmem>>, vector<8x1xf32>
    %37 = vector.broadcast %36 : vector<8x1xf32> to vector<8x256xf32>
    %38 = arith.addf %35, %37 : vector<8x256xf32>
    %c0_16 = arith.constant 0 : index
    %c0_17 = arith.constant 0 : index
    %c0_18 = arith.constant 0 : index
    %39 = vector.load %arg8[%c0_16, %c0_17, %c0_18] : memref<1x8x256xf32, #tpu.memory_space<vmem>>, vector<1x8x256xf32>
    %40 = vector.shape_cast %39 : vector<1x8x256xf32> to vector<8x256xf32>
    %41 = vector.shape_cast %38 : vector<8x256xf32> to vector<1x8x256xf32>
    tpu.vector_store %arg8[%c0_16, %c0_17, %c0_18], %41 {strides = array<i32>} : memref<1x8x256xf32, #tpu.memory_space<vmem>>, vector<1x8x256xf32>,
    return
  }
  func.func @transform_0(%arg0: i32, %arg1: i32) -> (i32, i32, i32) {
    %c0_i32 = arith.constant 0 : i32
    %c0_i32_0 = arith.constant 0 : i32
    return %arg0, %c0_i32, %arg1 : i32, i32, i32
  }
  func.func @transform_1(%arg0: i32, %arg1: i32) -> (i32, i32, i32) {
    %c0_i32 = arith.constant 0 : i32
    %c0_i32_0 = arith.constant 0 : i32
    %c0_i32_1 = arith.constant 0 : i32
    return %arg0, %c0_i32, %c0_i32_0 : i32, i32, i32
  }
  func.func @transform_2(%arg0: i32, %arg1: i32) -> (i32, i32, i32) {
    %c0_i32 = arith.constant 0 : i32
    %c0_i32_0 = arith.constant 0 : i32
    %c0_i32_1 = arith.constant 0 : i32
    return %arg0, %c0_i32, %c0_i32_0 : i32, i32, i32
  }
  func.func @transform_3(%arg0: i32, %arg1: i32) -> (i32, i32) {
    %c0_i32 = arith.constant 0 : i32
    %c0_i32_0 = arith.constant 0 : i32
    %c0_i32_1 = arith.constant 0 : i32
    return %c0_i32, %c0_i32_0 : i32, i32
  }
  func.func @transform_4(%arg0: i32, %arg1: i32) -> (i32, i32) {
    %c0_i32 = arith.constant 0 : i32
    %c0_i32_0 = arith.constant 0 : i32
    %c0_i32_1 = arith.constant 0 : i32
    return %c0_i32, %c0_i32_0 : i32, i32
  }
  func.func @transform_5(%arg0: i32, %arg1: i32) -> (i32, i32) {
    %c0_i32 = arith.constant 0 : i32
    %c0_i32_0 = arith.constant 0 : i32
    %c0_i32_1 = arith.constant 0 : i32
    return %c0_i32, %c0_i32_0 : i32, i32
  }
  func.func @transform_6(%arg0: i32, %arg1: i32) -> (i32, i32, i32) {
    %c0_i32 = arith.constant 0 : i32
    %c0_i32_0 = arith.constant 0 : i32
    return %arg0, %c0_i32, %arg1 : i32, i32, i32
  }
}

</mosaic_0001>

<llo_original>
// kernel: custom-call.1
$region0: #{custom-call.1}
  %s0 = inlined_call_operand.hbm [shape: c64[2,4,16,16], index: 0, kind: input, shape index: {}]
  %s1 = inlined_call_operand.vmem [shape: f32[2,4,16,16], index: 1, kind: output, shape index: {}]
  %s2 = scalar_lea.hbm %s0, 2048
  $region1: #{custom-call.1} parent=0
    #allocation0 [shape = 's32[1]{0}', space=sflag, size = 0x4, scoped, tag = 'scoped memory for custom-call.1']
    %3 = vsyncpa [#allocation0], 0
    %s4 = sshll.u32 %s1, 4
    %s5 = int_to_ptr.vmem [resolvable:$true] %s4
    %7 = dma.hbm_to_vmem [thread:$0]  %s2, 2048, %s5, [#allocation0]
    %8 = dma.done [#allocation0], 2048
    %9 = vsyncpa [#allocation0], 1

// kernel: custom-call
$region0: #{custom-call}
  %s0 = inlined_call_operand.hbm [shape: c64[2,4,16,16], index: 0, kind: input, shape index: {}]
  %s1 = inlined_call_operand.vmem [shape: f32[2,4,16,16], index: 1, kind: output, shape index: {}]
  $region1: #{custom-call} parent=0
    #allocation0 [shape = 's32[1]{0}', space=sflag, size = 0x4, scoped, tag = 'scoped memory for custom-call']
    %2 = vsyncpa [#allocation0], 0
    %s3 = sshll.u32 %s1, 4
    %s4 = int_to_ptr.vmem [resolvable:$true] %s3
    %6 = dma.hbm_to_vmem [thread:$0]  %s0, 2048, %s4, [#allocation0]
    %7 = dma.done [#allocation0], 2048
    %8 = vsyncpa [#allocation0], 1

// kernel: custom-call.2
$region0: #{custom-call.2}
  %s0 = inlined_call_operand.vmem [shape: f32[2,4,16,16], index: 0, kind: input, shape index: {}]
  %s1 = inlined_call_operand.vmem [shape: f32[2,4,16,16], index: 1, kind: input, shape index: {}]
  %s2 = inlined_call_operand.hbm [shape: c64[2,4,16,16], index: 2, kind: output, shape index: {}]
  %s3 = scalar_lea.hbm %s2, 2048
  $region1: #{custom-call.2} parent=0
    #allocation0 [shape = 's32[1]{0}', space=sflag, size = 0x4, scoped, tag = 'scoped memory for custom-call.2']
    %4 = vsyncpa [#allocation0], 0
    %s5 = sshll.u32 %s0, 4
    %s6 = int_to_ptr.vmem [resolvable:$true] %s5
    %8 = dma.vmem_to_hbm [thread:$0]  %s6, 2048, %s2, [#allocation0]
    %9 = dma.done [#allocation0], 2048
    %10 = vsyncpa [#allocation0], 1
  $region2: #{custom-call.2} parent=0
    #allocation1 [shape = 's32[1]{0}', space=sflag, size = 0x4, scoped, tag = 'scoped memory for custom-call.2']
    %11 = vsyncpa [#allocation1], 0
    %s12 = sshll.u32 %s1, 4
    %s13 = int_to_ptr.vmem [resolvable:$true] %s12
    %15 = dma.vmem_to_hbm [thread:$0]  %s13, 2048, %s3, [#allocation1]
    %16 = dma.done [#allocation1], 2048
    %17 = vsyncpa [#allocation1], 1

// kernel: run.1
$region0: #{run.1}
  #allocation0 [shape = 'u32[]', space=smem, size = 0x4, offset = 0x4, fixed_abs, tag = 'smem constant byte address 0x4 - core index']
  #allocation1 [shape = 'u32[144,128]{1,0:T(1,128)}', space=vmem, size = 0x12000, scoped, tag = 'internal scratch']
  %s0 = inlined_call_operand.vmem [shape: f32[2,8,256], index: 0, kind: input, shape index: {}]
  %s1 = inlined_call_operand.vmem [shape: f32[2,2,64], index: 1, kind: input, shape index: {}]
  %s2 = inlined_call_operand.vmem [shape: f32[2,32,1], index: 2, kind: input, shape index: {}]
  %s3 = inlined_call_operand.vmem [shape: f32[64,8], index: 3, kind: input, shape index: {}]
  %s4 = inlined_call_operand.vmem [shape: f32[8,64], index: 4, kind: input, shape index: {}]
  %s5 = inlined_call_operand.vmem [shape: f32[8,1], index: 5, kind: input, shape index: {}]
  %s6 = inlined_call_operand.vmem [shape: f32[2,8,256], index: 6, kind: output, shape index: {}]
  %s7 = sld [smem:[#allocation0]]
  $region57: #{run.1} parent=0
    _
  %s9 = ssub.s32 1, %s7
  %s10 = scalar_select 0, %s9, %s7
  loop: start=0, step=1, limit=4
  $region2: #{run.1} parent=0 // loop_pre_header
    _
  $region3: #{run.1} parent=0 // loop_header
    %s12 = sphi 0, %s16
    %p13 = scmp.ge.s32.totalorder %s12, 4
    %s19 = sphi 0, %s31
    %s20 = sphi 0, %s27
    %s21 = sphi 0, %s19
    %s22 = sphi 0, %s20
    %s23 = sphi 0, %s21
    %s24 = sphi 0, %s22
    %s36 = sphi 0, %s38
    %s39 = sphi 0, %s36
    %s40 = sphi 0, %s39
    %s56 = sphi 0, %s40
    %s62 = sphi 0, %s64
    %s65 = sphi 0, %s62
    %s66 = sphi 0, %s65
    %s82 = sphi 0, %s66
    %s88 = sphi 0, %s90
    %s91 = sphi 0, %s88
    %s92 = sphi 0, %s91
    %s108 = sphi 0, %s92
    %s112 = sphi 0, %s112
    %s114 = sphi 0, %s112
    %s115 = sphi 0, %s114
    %s129 = sphi 0, %s115
    %s133 = sphi 0, %s133
    %s135 = sphi 0, %s133
    %s136 = sphi 0, %s135
    %s150 = sphi 0, %s136
    %s154 = sphi 0, %s154
    %s156 = sphi 0, %s154
    %s157 = sphi 0, %s156
    %s171 = sphi 0, %s157
    %s179 = sphi 0, %s181
    %s182 = sphi 0, %s179
    %s183 = sphi 0, %s182
    %s199 = sphi 0, %s183
  $region4: #{run.1} parent=0 // loop_header_branch
    %15 = sbr.rel (%p13) target = $region8
  $region5: #{run.1} parent=0 // loop_body
    %s17 = ssub.s32 %s12, 1
    %s18 = ssub.s32 %s12, 2
    %s25 = sadd.s32 1, %s20
    %p26 = scmp.ge.s32.totalorder %s25, 1
    %s27 = scalar_select %p26, 0, %s25
    %s28 = sadd.s32 1, %s19
    %s29 = scalar_select %p26, %s28, %s19
    %p30 = scmp.ge.s32.totalorder %s29, 2
    %s31 = scalar_select %p30, 0, %s29
    %s32 = ssub.s32 %s19, %s31
    %s33 = ssub.s32 %s20, %s27
    %s34 = sor.u32 %s32, %s33
    %p35 = scmp.eq.s32.totalorder %s34, 0
    %s37 = sadd.s32 %s36, 1
    %s38 = scalar_select %p35, %s36, %s37
    %p41 = pneg %p35
    %p42 = scmp.eq.s32.totalorder %s12, 1
    %p43 = por %p41, %p42
    %p44 = scmp.ne.s32.totalorder %s36, %s39
    %p45 = scmp.eq.s32.totalorder %s12, 0
    %p46 = por %p44, %p45
    %p47 = scmp.ne.s32.totalorder %s36, %s39
    %p48 = scmp.eq.s32.totalorder %s17, 1
    %p49 = por %p47, %p48
    %p50 = scmp.ne.s32.totalorder %s39, %s40
    %p51 = scmp.eq.s32.totalorder %s17, 0
    %p52 = por %p50, %p51
    %p53 = scmp.ne.s32.totalorder %s39, %s40
    %p54 = scmp.eq.s32.totalorder %s18, 1
    %p55 = por %p53, %p54
    %p57 = scmp.ne.s32.totalorder %s40, %s56
    %p58 = scmp.eq.s32.totalorder %s18, 0
    %p59 = por %p57, %p58
    %s60 = ssub.s32 %s19, %s31
    %p61 = scmp.eq.s32.totalorder %s60, 0
    %s63 = sadd.s32 %s62, 1
    %s64 = scalar_select %p61, %s62, %s63
    %p67 = pneg %p61
    %p68 = scmp.eq.s32.totalorder %s12, 1
    %p69 = por %p67, %p68
    %p70 = scmp.ne.s32.totalorder %s62, %s65
    %p71 = scmp.eq.s32.totalorder %s12, 0
    %p72 = por %p70, %p71
    %p73 = scmp.ne.s32.totalorder %s62, %s65
    %p74 = scmp.eq.s32.totalorder %s17, 1
    %p75 = por %p73, %p74
    %p76 = scmp.ne.s32.totalorder %s65, %s66
    %p77 = scmp.eq.s32.totalorder %s17, 0
    %p78 = por %p76, %p77
    %p79 = scmp.ne.s32.totalorder %s65, %s66
    %p80 = scmp.eq.s32.totalorder %s18, 1
    %p81 = por %p79, %p80
    %p83 = scmp.ne.s32.totalorder %s66, %s82
    %p84 = scmp.eq.s32.totalorder %s18, 0
    %p85 = por %p83, %p84
    %s86 = ssub.s32 %s19, %s31
    %p87 = scmp.eq.s32.totalorder %s86, 0
    %s89 = sadd.s32 %s88, 1
    %s90 = scalar_select %p87, %s88, %s89
    %p93 = pneg %p87
    %p94 = scmp.eq.s32.totalorder %s12, 1
    %p95 = por %p93, %p94
    %p96 = scmp.ne.s32.totalorder %s88, %s91
    %p97 = scmp.eq.s32.totalorder %s12, 0
    %p98 = por %p96, %p97
    %p99 = scmp.ne.s32.totalorder %s88, %s91
    %p100 = scmp.eq.s32.totalorder %s17, 1
    %p101 = por %p99, %p100
    %p102 = scmp.ne.s32.totalorder %s91, %s92
    %p103 = scmp.eq.s32.totalorder %s17, 0
    %p104 = por %p102, %p103
    %p105 = scmp.ne.s32.totalorder %s91, %s92
    %p106 = scmp.eq.s32.totalorder %s18, 1
    %p107 = por %p105, %p106
    %p109 = scmp.ne.s32.totalorder %s92, %s108
    %p110 = scmp.eq.s32.totalorder %s18, 0
    %p111 = por %p109, %p110
    %s113 = sadd.s32 %s112, 1
    %p116 = scmp.eq.s32.totalorder %s12, 1
    %p117 = scmp.ne.s32.totalorder %s112, %s114
    %p118 = scmp.eq.s32.totalorder %s12, 0
    %p119 = por %p117, %p118
    %p120 = scmp.ne.s32.totalorder %s112, %s114
    %p121 = scmp.eq.s32.totalorder %s17, 1
    %p122 = por %p120, %p121
    %p123 = scmp.ne.s32.totalorder %s114, %s115
    %p124 = scmp.eq.s32.totalorder %s17, 0
    %p125 = por %p123, %p124
    %p126 = scmp.ne.s32.totalorder %s114, %s115
    %p127 = scmp.eq.s32.totalorder %s18, 1
    %p128 = por %p126, %p127
    %p130 = scmp.ne.s32.totalorder %s115, %s129
    %p131 = scmp.eq.s32.totalorder %s18, 0
    %p132 = por %p130, %p131
    %s134 = sadd.s32 %s133, 1
    %p137 = scmp.eq.s32.totalorder %s12, 1
    %p138 = scmp.ne.s32.totalorder %s133, %s135
    %p139 = scmp.eq.s32.totalorder %s12, 0
    %p140 = por %p138, %p139
    %p141 = scmp.ne.s32.totalorder %s133, %s135
    %p142 = scmp.eq.s32.totalorder %s17, 1
    %p143 = por %p141, %p142
    %p144 = scmp.ne.s32.totalorder %s135, %s136
    %p145 = scmp.eq.s32.totalorder %s17, 0
    %p146 = por %p144, %p145
    %p147 = scmp.ne.s32.totalorder %s135, %s136
    %p148 = scmp.eq.s32.totalorder %s18, 1
    %p149 = por %p147, %p148
    %p151 = scmp.ne.s32.totalorder %s136, %s150
    %p152 = scmp.eq.s32.totalorder %s18, 0
    %p153 = por %p151, %p152
    %s155 = sadd.s32 %s154, 1
    %p158 = scmp.eq.s32.totalorder %s12, 1
    %p159 = scmp.ne.s32.totalorder %s154, %s156
    %p160 = scmp.eq.s32.totalorder %s12, 0
    %p161 = por %p159, %p160
    %p162 = scmp.ne.s32.totalorder %s154, %s156
    %p163 = scmp.eq.s32.totalorder %s17, 1
    %p164 = por %p162, %p163
    %p165 = scmp.ne.s32.totalorder %s156, %s157
    %p166 = scmp.eq.s32.totalorder %s17, 0
    %p167 = por %p165, %p166
    %p168 = scmp.ne.s32.totalorder %s156, %s157
    %p169 = scmp.eq.s32.totalorder %s18, 1
    %p170 = por %p168, %p169
    %p172 = scmp.ne.s32.totalorder %s157, %s171
    %p173 = scmp.eq.s32.totalorder %s18, 0
    %p174 = por %p172, %p173
    %s175 = ssub.s32 %s19, %s31
    %s176 = ssub.s32 %s20, %s27
    %s177 = sor.u32 %s175, %s176
    %p178 = scmp.eq.s32.totalorder %s177, 0
    %s180 = sadd.s32 %s179, 1
    %s181 = scalar_select %p178, %s179, %s180
    %p184 = pneg %p178
    %p185 = scmp.eq.s32.totalorder %s12, 1
    %p186 = por %p184, %p185
    %p187 = scmp.ne.s32.totalorder %s179, %s182
    %p188 = scmp.eq.s32.totalorder %s12, 0
    %p189 = por %p187, %p188
    %p190 = scmp.ne.s32.totalorder %s179, %s182
    %p191 = scmp.eq.s32.totalorder %s17, 1
    %p192 = por %p190, %p191
    %p193 = scmp.ne.s32.totalorder %s182, %s183
    %p194 = scmp.eq.s32.totalorder %s17, 0
    %p195 = por %p193, %p194
    %p196 = scmp.ne.s32.totalorder %s182, %s183
    %p197 = scmp.eq.s32.totalorder %s18, 1
    %p198 = por %p196, %p197
    %p200 = scmp.ne.s32.totalorder %s183, %s199
    %p201 = scmp.eq.s32.totalorder %s18, 0
    %p202 = por %p200, %p201
    %p203 = scmp.le.s32.totalorder 1, %s12
    %p204 = scmp.lt.s32.totalorder %s12, 3
    %p205 = pnand %p203, %p204
    %p206 = pneg %p205
    // Predicated region
    $region9: #{run.1} parent=5 // pred_check
      _
    $region10: #{run.1} parent=5 // pred_check_branch
      %208 = sbr.rel (%p205) target = $region12
    $region11: #{run.1} parent=5 // pred_region
      %s209 = ssub.s32 %s12, 1
      // Predicated region
      $region13: #{run.1} parent=11 // pred_check
        %p210 = pneg %p125
      $region14: #{run.1} parent=11 // pred_check_branch
        %212 = sbr.rel (%p210) target = $region16
      $region15: #{run.1} parent=11 // pred_region
        _
      $region16: #{run.1} parent=11 // pred_fallthru
        _
      // Predicated region
      $region17: #{run.1} parent=11 // pred_check
        %p213 = pneg %p146
      $region18: #{run.1} parent=11 // pred_check_branch
        %215 = sbr.rel (%p213) target = $region20
      $region19: #{run.1} parent=11 // pred_region
        _
      $region20: #{run.1} parent=11 // pred_fallthru
        _
      // Predicated region
      $region21: #{run.1} parent=11 // pred_check
        %p216 = pneg %p167
      $region22: #{run.1} parent=11 // pred_check_branch
        %218 = sbr.rel (%p216) target = $region24
      $region23: #{run.1} parent=11 // pred_region
        _
      $region24: #{run.1} parent=11 // pred_fallthru
        _
    $region12: #{run.1} parent=5 // pred_fallthru
      _
    %p219 = scmp.lt.s32.totalorder %s12, 2
    // Predicated region
    $region25: #{run.1} parent=5 // pred_check
      %p220 = pneg %p219
    $region26: #{run.1} parent=5 // pred_check_branch
      %222 = sbr.rel (%p220) target = $region28
    $region27: #{run.1} parent=5 // pred_region
      // Predicated region
      $region29: #{run.1} parent=27 // pred_check
        %p223 = pneg %p46
      $region30: #{run.1} parent=27 // pred_check_branch
        %225 = sbr.rel (%p223) target = $region32
      $region31: #{run.1} parent=27 // pred_region
        %s226 = smul.u32 2, %s20
        %p227 = scmp.lt.s32.totalorder %s19, 1
        %s228 = scalar_select %p227, %s19, 1
        %p229 = scmp.lt.s32.totalorder %s226, 1
        %s230 = scalar_select %p229, %s226, 1
        %s231 = smul.addr %s228, 2
        %s232 = sadd.s32 %s230, %s231
        %s233 = smul.addr %s232, 8
        %s234 = scalar_lea.vmem %s0, %s233
        %s235 = smul.u32 2, %s20
      $region32: #{run.1} parent=27 // pred_fallthru
        _
      // Predicated region
      $region33: #{run.1} parent=27 // pred_check
        %p236 = pneg %p72
      $region34: #{run.1} parent=27 // pred_check_branch
        %238 = sbr.rel (%p236) target = $region36
      $region35: #{run.1} parent=27 // pred_region
        %p239 = scmp.lt.s32.totalorder %s19, 1
        %s240 = scalar_select %p239, %s19, 1
        %s241 = smul.addr %s240, 2
        %s242 = scalar_lea.vmem %s1, %s241
      $region36: #{run.1} parent=27 // pred_fallthru
        _
      // Predicated region
      $region37: #{run.1} parent=27 // pred_check
        %p243 = pneg %p98
      $region38: #{run.1} parent=27 // pred_check_branch
        %245 = sbr.rel (%p243) target = $region40
      $region39: #{run.1} parent=27 // pred_region
        %p246 = scmp.lt.s32.totalorder %s19, 1
        %s247 = scalar_select %p246, %s19, 1
        %s248 = smul.addr %s247, 4
        %s249 = smul.addr %s248, 8
        %s250 = scalar_lea.vmem %s2, %s249
      $region40: #{run.1} parent=27 // pred_fallthru
        _
    $region28: #{run.1} parent=5 // pred_fallthru
      _
    %p251 = scmp.le.s32.totalorder 1, %s12
    %p252 = scmp.lt.s32.totalorder %s12, 3
    %p253 = pnand %p251, %p252
    %p254 = pneg %p253
    // Predicated region
    $region41: #{run.1} parent=5 // pred_check
      _
    $region42: #{run.1} parent=5 // pred_check_branch
      %256 = sbr.rel (%p253) target = $region44
    $region43: #{run.1} parent=5 // pred_region
      %s257 = ssub.s32 %s12, 1
      %s258 = smul.u32 2, %s22
      %p259 = scmp.lt.s32.totalorder %s21, 1
      %s260 = scalar_select %p259, %s21, 1
      %p261 = scmp.lt.s32.totalorder %s258, 1
      %s262 = scalar_select %p261, %s258, 1
      %s263 = smul.addr %s260, 2
      %s264 = sadd.s32 %s262, %s263
      %s265 = smul.addr %s264, 8
      %s266 = scalar_lea.vmem %s0, %s265
      %p267 = pneg %p52
      %p268 = pneg %p49
      %p269 = scmp.lt.s32.totalorder %s21, 1
      %s270 = scalar_select %p269, %s21, 1
      %s271 = smul.addr %s270, 2
      %s272 = scalar_lea.vmem %s1, %s271
      %p273 = pneg %p78
      %p274 = pneg %p75
      %p275 = scmp.lt.s32.totalorder %s21, 1
      %s276 = scalar_select %p275, %s21, 1
      %s277 = smul.addr %s276, 4
      %s278 = smul.addr %s277, 8
      %s279 = scalar_lea.vmem %s2, %s278
      %p280 = pneg %p104
      %p281 = pneg %p101
      %p282 = pneg %p125
      %p283 = pneg %p122
      %p284 = pneg %p146
      %p285 = pneg %p143
      %p286 = pneg %p167
      %p287 = pneg %p164
      %p288 = pneg %p195
      %p289 = pneg %p192
      %s290 = smul.u32 2, %s22
      %p291 = scmp.lt.s32.totalorder %s21, 1
      %s292 = scalar_select %p291, %s21, 1
      %p293 = scmp.lt.s32.totalorder %s290, 1
      %s294 = scalar_select %p293, %s290, 1
      %s295 = smul.addr %s292, 2
      %s296 = sadd.s32 %s294, %s295
      %s297 = smul.addr %s296, 8
      %s298 = scalar_lea.vmem %s6, %s297
      %s299 = smul.u32 2, %s22
      %p300 = scmp.lt.s32.totalorder %s21, 1
      %s301 = scalar_select %p300, %s21, 1
      %p302 = scmp.lt.s32.totalorder %s299, 1
      %s303 = scalar_select %p302, %s299, 1
      %s304 = smul.addr %s301, 2
      %s305 = sadd.s32 %s303, %s304
      %s306 = smul.addr %s305, 8
      %s307 = scalar_lea.vmem %s0, %s306
      %s308 = smul.u32 2, %s22
      %p309 = scmp.lt.s32.totalorder %s21, 1
      %s310 = scalar_select %p309, %s21, 1
      %s311 = smul.addr %s310, 2
      %s312 = scalar_lea.vmem %s1, %s311
      %p313 = scmp.lt.s32.totalorder %s21, 1
      %s314 = scalar_select %p313, %s21, 1
      %s315 = smul.addr %s314, 4
      %s316 = smul.addr %s315, 8
      %s317 = scalar_lea.vmem %s2, %s316
      %s318 = smul.u32 2, %s22
      %p319 = scmp.lt.s32.totalorder %s21, 1
      %s320 = scalar_select %p319, %s21, 1
      %p321 = scmp.lt.s32.totalorder %s318, 1
      %s322 = scalar_select %p321, %s318, 1
      %s323 = smul.addr %s320, 2
      %s324 = sadd.s32 %s322, %s323
      %s325 = smul.addr %s324, 8
      %s326 = scalar_lea.vmem %s6, %s325
      %s327 = smul.u32 2, %s22
      %v328 = vld [vmem:[%s307] sm:$0xff]
      %v329 = vld [vmem:[%s307 + $0x8] sm:$0xff]
      %v330 = vld [vmem:[%s3] sm:$0xff]
      %v331 = vld [vmem:[%s3 + $0x8] sm:$0xff]
      %v332 = vld [vmem:[%s3 + $0x10] sm:$0xff]
      %v333 = vld [vmem:[%s3 + $0x18] sm:$0xff]
      %v334 = vld [vmem:[%s3 + $0x20] sm:$0xff]
      %v335 = vld [vmem:[%s3 + $0x28] sm:$0xff]
      %v336 = vld [vmem:[%s3 + $0x30] sm:$0xff]
      %v337 = vld [vmem:[%s3 + $0x38] sm:$0xff]
      %vm338 = vcmask 64512
      %v340 = vsel %vm338, %v330, 0
      %v343 = vsel %vm338, %v331, 0
      %v346 = vsel %vm338, %v332, 0
      %v349 = vsel %vm338, %v333, 0
      %v352 = vsel %vm338, %v334, 0
      %v355 = vsel %vm338, %v335, 0
      %v358 = vsel %vm338, %v336, 0
      %v361 = vsel %vm338, %v337, 0
      %363 = vmatprep.subr.mxu0 %v329
      %364 = vmatpush1.msra.mxu0 %v328
      %365 = vmatprep.subr.mxu0 0.0
      %366 = vmatpush1.msra.mxu0 0.0
      %367 = vmatprep.subr.mxu0 0.0
      %368 = vmatpush1.msra.mxu0 0.0
      %369 = vmatprep.subr.mxu0 0.0
      %370 = vmatpush1.msra.mxu0 0.0
      %371 = vmatprep.subr.mxu0 0.0
      %372 = vmatpush1.msra.mxu0 0.0
      %373 = vmatprep.subr.mxu0 0.0
      %374 = vmatpush1.msra.mxu0 0.0
      %375 = vmatprep.subr.mxu0 0.0
      %376 = vmatpush1.msra.mxu0 0.0
      %377 = vmatprep.subr.mxu0 0.0
      %378 = vmatpush1.msra.mxu0 0.0
      %379 = vmatprep.subr.mxu0 0.0
      %380 = vmatpush1.msra.mxu0 0.0
      %381 = vmatprep.subr.mxu0 0.0
      %382 = vmatpush1.msra.mxu0 0.0
      %383 = vmatprep.subr.mxu0 0.0
      %384 = vmatpush1.msra.mxu0 0.0
      %385 = vmatprep.subr.mxu0 0.0
      %386 = vmatpush1.msra.mxu0 0.0
      %387 = vmatprep.subr.mxu0 0.0
      %388 = vmatpush1.msra.mxu0 0.0
      %389 = vmatprep.subr.mxu0 0.0
      %390 = vmatpush1.msra.mxu0 0.0
      %391 = vmatprep.subr.mxu0 0.0
      %392 = vmatpush1.msra.mxu0 0.0
      %393 = vmatprep.subr.mxu0 0.0
      %394 = vmatpush1.msra.mxu0 0.0
      %395 = vmatprep.subr.mxu0 0.0
      %396 = vmatpush1.msra.mxu0 0.0
      %397 = vmatprep.subr.mxu0 0.0
      %398 = vmatpush1.msra.mxu0 0.0
      %399 = vmatprep.subr.mxu0 0.0
      %400 = vmatpush1.msra.mxu0 0.0
      %401 = vmatprep.subr.mxu0 0.0
      %402 = vmatpush1.msra.mxu0 0.0
      %403 = vmatprep.subr.mxu0 0.0
      %404 = vmatpush1.msra.mxu0 0.0
      %405 = vmatprep.subr.mxu0 0.0
      %406 = vmatpush1.msra.mxu0 0.0
      %407 = vmatprep.subr.mxu0 0.0
      %408 = vmatpush1.msra.mxu0 0.0
      %409 = vmatprep.subr.mxu0 0.0
      %410 = vmatpush1.msra.mxu0 0.0
      %411 = vmatprep.subr.mxu0 0.0
      %412 = vmatpush1.msra.mxu0 0.0
      %413 = vmatprep.subr.mxu0 0.0
      %414 = vmatpush1.msra.mxu0 0.0
      %415 = vmatprep.subr.mxu0 0.0
      %416 = vmatpush1.msra.mxu0 0.0
      %417 = vmatprep.subr.mxu0 0.0
      %418 = vmatpush1.msra.mxu0 0.0
      %419 = vmatprep.subr.mxu0 0.0
      %420 = vmatpush1.msra.mxu0 0.0
      %421 = vmatprep.subr.mxu0 0.0
      %422 = vmatpush1.msra.mxu0 0.0
      %423 = vmatprep.subr.mxu0 0.0
      %424 = vmatpush1.msra.mxu0 0.0
      %425 = vmatprep.subr.mxu0 0.0
      %426 = vmatpush1.msra.mxu0 0.0
      %427 = vmatprep.mubr.f32.mxu0 0.0
      %428 = vmatmul.mubr.f32.gmra.mrb[0].mxu0 %v340
      %v429 = vpop.f32.mrb[0].mxu0
      %v430 = vadd.f32 0.0, %v429
      %v431 = vpop.f32.mrb[0].mxu0
      %v432 = vadd.f32 0.0, %v431
      %433 = vmatprep.mubr.f32.mxu0 0.0
      %434 = vmatmul.mubr.f32.gmra.mrb[0].mxu0 %v343
      %v435 = vpop.f32.mrb[0].mxu0
      %v436 = vadd.f32 0.0, %v435
      %v437 = vpop.f32.mrb[0].mxu0
      %v438 = vadd.f32 0.0, %v437
      %439 = vmatprep.mubr.f32.mxu0 0.0
      %440 = vmatmul.mubr.f32.gmra.mrb[0].mxu0 %v346
      %v441 = vpop.f32.mrb[0].mxu0
      %v442 = vadd.f32 0.0, %v441
      %v443 = vpop.f32.mrb[0].mxu0
      %v444 = vadd.f32 0.0, %v443
      %445 = vmatprep.mubr.f32.mxu0 0.0
      %446 = vmatmul.mubr.f32.gmra.mrb[0].mxu0 %v349
      %v447 = vpop.f32.mrb[0].mxu0
      %v448 = vadd.f32 0.0, %v447
      %v449 = vpop.f32.mrb[0].mxu0
      %v450 = vadd.f32 0.0, %v449
      %451 = vmatprep.mubr.f32.mxu0 0.0
      %452 = vmatmul.mubr.f32.gmra.mrb[0].mxu0 %v352
      %v453 = vpop.f32.mrb[0].mxu0
      %v454 = vadd.f32 0.0, %v453
      %v455 = vpop.f32.mrb[0].mxu0
      %v456 = vadd.f32 0.0, %v455
      %457 = vmatprep.mubr.f32.mxu0 0.0
      %458 = vmatmul.mubr.f32.gmra.mrb[0].mxu0 %v355
      %v459 = vpop.f32.mrb[0].mxu0
      %v460 = vadd.f32 0.0, %v459
      %v461 = vpop.f32.mrb[0].mxu0
      %v462 = vadd.f32 0.0, %v461
      %463 = vmatprep.mubr.f32.mxu0 0.0
      %464 = vmatmul.mubr.f32.gmra.mrb[0].mxu0 %v358
      %v465 = vpop.f32.mrb[0].mxu0
      %v466 = vadd.f32 0.0, %v465
      %v467 = vpop.f32.mrb[0].mxu0
      %v468 = vadd.f32 0.0, %v467
      %469 = vmatprep.mubr.f32.mxu0 0.0
      %470 = vmatmul.mubr.f32.gmra.mrb[0].mxu0 %v361
      %v471 = vpop.f32.mrb[0].mxu0
      %v472 = vadd.f32 0.0, %v471
      %v473 = vpop.f32.mrb[0].mxu0
      %v474 = vadd.f32 0.0, %v473
      %475 = vdwg.mxu0
      %v476 = vld [vmem:[%s312] sm:$0x3]
      %vm477 = vcmask 523264
      %v479 = vsel %vm477, %v476, 0
      %481 = vmatprep.subr.mxu0 %v432
      %482 = vmatpush1.msra.mxu0 %v430
      %483 = vmatprep.subr.mxu0 %v438
      %484 = vmatpush1.msra.mxu0 %v436
      %485 = vmatprep.subr.mxu0 %v444
      %486 = vmatpush1.msra.mxu0 %v442
      %487 = vmatprep.subr.mxu0 %v450
      %488 = vmatpush1.msra.mxu0 %v448
      %489 = vmatprep.subr.mxu0 %v456
      %490 = vmatpush1.msra.mxu0 %v454
      %491 = vmatprep.subr.mxu0 %v462
      %492 = vmatpush1.msra.mxu0 %v460
      %493 = vmatprep.subr.mxu0 %v468
      %494 = vmatpush1.msra.mxu0 %v466
      %495 = vmatprep.subr.mxu0 %v474
      %496 = vmatpush1.msra.mxu0 %v472
      %497 = vmatprep.subr.mxu0 0.0
      %498 = vmatpush1.msra.mxu0 0.0
      %499 = vmatprep.subr.mxu0 0.0
      %500 = vmatpush1.msra.mxu0 0.0
      %501 = vmatprep.subr.mxu0 0.0
      %502 = vmatpush1.msra.mxu0 0.0
      %503 = vmatprep.subr.mxu0 0.0
      %504 = vmatpush1.msra.mxu0 0.0
      %505 = vmatprep.subr.mxu0 0.0
      %506 = vmatpush1.msra.mxu0 0.0
      %507 = vmatprep.subr.mxu0 0.0
      %508 = vmatpush1.msra.mxu0 0.0
      %509 = vmatprep.subr.mxu0 0.0
      %510 = vmatpush1.msra.mxu0 0.0
      %511 = vmatprep.subr.mxu0 0.0
      %512 = vmatpush1.msra.mxu0 0.0
      %513 = vmatprep.subr.mxu0 0.0
      %514 = vmatpush1.msra.mxu0 0.0
      %515 = vmatprep.subr.mxu0 0.0
      %516 = vmatpush1.msra.mxu0 0.0
      %517 = vmatprep.subr.mxu0 0.0
      %518 = vmatpush1.msra.mxu0 0.0
      %519 = vmatprep.subr.mxu0 0.0
      %520 = vmatpush1.msra.mxu0 0.0
      %521 = vmatprep.subr.mxu0 0.0
      %522 = vmatpush1.msra.mxu0 0.0
      %523 = vmatprep.subr.mxu0 0.0
      %524 = vmatpush1.msra.mxu0 0.0
      %525 = vmatprep.subr.mxu0 0.0
      %526 = vmatpush1.msra.mxu0 0.0
      %527 = vmatprep.subr.mxu0 0.0
      %528 = vmatpush1.msra.mxu0 0.0
      %529 = vmatprep.subr.mxu0 0.0
      %530 = vmatpush1.msra.mxu0 0.0
      %531 = vmatprep.subr.mxu0 0.0
      %532 = vmatpush1.msra.mxu0 0.0
      %533 = vmatprep.subr.mxu0 0.0
      %534 = vmatpush1.msra.mxu0 0.0
      %535 = vmatprep.subr.mxu0 0.0
      %536 = vmatpush1.msra.mxu0 0.0
      %537 = vmatprep.subr.mxu0 0.0
      %538 = vmatpush1.msra.mxu0 0.0
      %539 = vmatprep.subr.mxu0 0.0
      %540 = vmatpush1.msra.mxu0 0.0
      %541 = vmatprep.subr.mxu0 0.0
      %542 = vmatpush1.msra.mxu0 0.0
      %543 = vmatprep.subr.mxu0 0.0
      %544 = vmatpush1.msra.mxu0 0.0
      %545 = vmatprep.mubr.f32.mxu0 0.0
      %546 = vmatmul.mubr.f32.gmra.mrb[0].mxu0 %v479
      %v547 = vpop.f32.mrb[0].mxu0
      %v548 = vadd.f32 0.0, %v547
      %v549 = vpop.f32.mrb[0].mxu0
      %v550 = vadd.f32 0.0, %v549
      %551 = vdwg.mxu0
      %v552 = vmul.f32 %v548, 1.442695
      %v553 = vpow.pop %v552
      %v554 = vmul.f32 %v550, 1.442695
      %v555 = vpow.pop %v554
      %v556 = vand.u32 2147483647, %v548
      %vm557 = vcmp.le.f32.partialorder %v556, 0.7853982
      %vm558 = vcmp.lt.s32.totalorder %v548, 0
      %v559 = vand.u32 %v548, 2139095040
      %v560 = vshrl.u32 %v559, 23
      %v561 = vsub.s32 %v560, 127
      %v562 = vand.u32 2147483647, %v548
      %v563 = vand.u32 %v562, 8388607
      %v564 = vor.u32 %v563, 8388608
      %v565 = vsub.s32 0, %v564
      %v566 = vadd.s32 %v561, 1
      %vm567 = vcmp.gt.s32.totalorder %v566, 0
      %v568 = vsel %vm567, %v566, 0
      %v569 = vshrl.u32 %v568, 5
      %v570 = vand.u32 %v568, 31
      %v571 = vsub.s32 32, %v570
      %v572 = vshrl.u32 683565275, %v571
      %v573 = vshll.u32 683565275, %v570
      %v574 = vshrl.u32 2475754826, %v571
      %v575 = vor.u32 %v573, %v574
      %v576 = vshll.u32 2475754826, %v570
      %v577 = vshrl.u32 2131351028, %v571
      %v578 = vor.u32 %v576, %v577
      %v579 = vshll.u32 2131351028, %v570
      %v580 = vshrl.u32 2102212464, %v571
      %v581 = vor.u32 %v579, %v580
      %v582 = vshll.u32 2102212464, %v570
      %v583 = vshrl.u32 920167782, %v571
      %v584 = vor.u32 %v582, %v583
      %v585 = vshll.u32 920167782, %v570
      %v586 = vshrl.u32 1326507024, %v571
      %v587 = vor.u32 %v585, %v586
      %vm588 = vcmp.lt.s32.totalorder %v569, 1
      %vm589 = vcmp.lt.s32.totalorder %v569, 2
      %vm590 = vcmp.lt.s32.totalorder %v569, 3
      %vm591 = vcmp.lt.s32.totalorder %v569, 4
      %v592 = vsel %vm588, %v572, %v575
      %v593 = vsel %vm591, %v581, 2102212464
      %v594 = vsel %vm590, %v578, %v593
      %v595 = vsel %vm589, %v592, %v594
      %v596 = vsel %vm588, %v575, %v578
      %v597 = vsel %vm591, %v584, 920167782
      %v598 = vsel %vm590, %v581, %v597
      %v599 = vsel %vm589, %v596, %v598
      %v600 = vsel %vm588, %v578, %v581
      %v601 = vsel %vm591, %v587, 1326507024
      %v602 = vsel %vm590, %v584, %v601
      %v603 = vsel %vm589, %v600, %v602
      %v604 = vshll.u32 %v564, 8
      %v605 = vmul.u32.u64.compose %v604, %v603
      %v606 = vextract.low.u32 %v605
      %v607 = vextract.high.u32 %v605
      %v608 = vmul.u32.u64.compose %v604, %v599
      %v609 = vextract.low.u32 %v608
      %v610 = vextract.high.u32 %v608
      %v611 = vmul.u32 %v604, %v595
      %v612 = vadd.s32 %v607, %v609
      %vm613 = vc.u32 %v607, %v609
      %v614 = vadd.s32 %v610, 1
      %v615 = vsel %vm613, %v614, %v610
      %v616 = vadd.s32 %v611, %v615
      %v617 = vadd.s32 %v616, 536870912
      %v618 = vshrl.u32 %v617, 30
      %v619 = vshll.u32 %v618, 30
      %v620 = vsub.s32 %v616, %v619
      %vm621 = vcmp.lt.s32.totalorder %v620, 0
      %v622 = vsub.s32 0, %v620
      %v623 = vsel %vm621, %v622, %v620
      %v624 = vclz %v623
      %v625 = vsub.s32 %v624, 2
      %vm626 = vcmp.gt.s32.totalorder 0, %v625
      %v627 = vsel %vm626, 0, %v625
      %v628 = vsub.s32 32, %v627
      %v629 = vshll.u32 %v620, %v627
      %v630 = vshrl.u32 %v612, %v628
      %v631 = vor.u32 %v629, %v630
      %v632 = vsub.s32 4294967266, %v627
      %v633 = vadd.s32 %v632, 127
      %v634 = vshll.u32 %v633, 23
      %v635 = vor.u32 4788187, %v634
      %v636 = vand.u32 2147483647, %v635
      %v638 = vcvt.s32.f32 %v631
      %v639 = vmul.f32 %v638, %v636
      %v640 = vxor.u32 %v639, 2147483648
      %v641 = vsel %vm558, %v640, %v639
      %v642 = vsub.s32 4, %v618
      %v643 = vsel %vm558, %v642, %v618
      %v644 = vsel %vm557, %v548, %v641
      %v645 = vsel %vm557, 0, %v643
      %v646 = vcosq.f32.pop %v644
      %v647 = vsinq.f32.pop %v644
      %vm648 = vweird.f32 %v548
      %v649 = vand.u32 %v645, 3
      %vm650 = vcmp.lt.s32.totalorder %v649, 2
      %vm651 = vcmp.eq.s32.totalorder %v649, 0
      %v652 = vxor.u32 %v647, 2147483648
      %v653 = vsel %vm651, %v646, %v652
      %vm654 = vcmp.eq.s32.totalorder %v649, 2
      %v655 = vxor.u32 %v646, 2147483648
      %v656 = vsel %vm654, %v655, %v647
      %v657 = vsel %vm650, %v653, %v656
      %v658 = vsel %vm648, nan, %v657
      %v659 = vand.u32 2147483647, %v550
      %vm660 = vcmp.le.f32.partialorder %v659, 0.7853982
      %vm661 = vcmp.lt.s32.totalorder %v550, 0
      %v662 = vand.u32 %v550, 2139095040
      %v663 = vshrl.u32 %v662, 23
      %v664 = vsub.s32 %v663, 127
      %v665 = vand.u32 2147483647, %v550
      %v666 = vand.u32 %v665, 8388607
      %v667 = vor.u32 %v666, 8388608
      %v668 = vsub.s32 0, %v667
      %v669 = vadd.s32 %v664, 1
      %vm670 = vcmp.gt.s32.totalorder %v669, 0
      %v671 = vsel %vm670, %v669, 0
      %v672 = vshrl.u32 %v671, 5
      %v673 = vand.u32 %v671, 31
      %v674 = vsub.s32 32, %v673
      %v675 = vshrl.u32 683565275, %v674
      %v676 = vshll.u32 683565275, %v673
      %v677 = vshrl.u32 2475754826, %v674
      %v678 = vor.u32 %v676, %v677
      %v679 = vshll.u32 2475754826, %v673
      %v680 = vshrl.u32 2131351028, %v674
      %v681 = vor.u32 %v679, %v680
      %v682 = vshll.u32 2131351028, %v673
      %v683 = vshrl.u32 2102212464, %v674
      %v684 = vor.u32 %v682, %v683
      %v685 = vshll.u32 2102212464, %v673
      %v686 = vshrl.u32 920167782, %v674
      %v687 = vor.u32 %v685, %v686
      %v688 = vshll.u32 920167782, %v673
      %v689 = vshrl.u32 1326507024, %v674
      %v690 = vor.u32 %v688, %v689
      %vm691 = vcmp.lt.s32.totalorder %v672, 1
      %vm692 = vcmp.lt.s32.totalorder %v672, 2
      %vm693 = vcmp.lt.s32.totalorder %v672, 3
      %vm694 = vcmp.lt.s32.totalorder %v672, 4
      %v695 = vsel %vm691, %v675, %v678
      %v696 = vsel %vm694, %v684, 2102212464
      %v697 = vsel %vm693, %v681, %v696
      %v698 = vsel %vm692, %v695, %v697
      %v699 = vsel %vm691, %v678, %v681
      %v700 = vsel %vm694, %v687, 920167782
      %v701 = vsel %vm693, %v684, %v700
      %v702 = vsel %vm692, %v699, %v701
      %v703 = vsel %vm691, %v681, %v684
      %v704 = vsel %vm694, %v690, 1326507024
      %v705 = vsel %vm693, %v687, %v704
      %v706 = vsel %vm692, %v703, %v705
      %v707 = vshll.u32 %v667, 8
      %v708 = vmul.u32.u64.compose %v707, %v706
      %v709 = vextract.low.u32 %v708
      %v710 = vextract.high.u32 %v708
      %v711 = vmul.u32.u64.compose %v707, %v702
      %v712 = vextract.low.u32 %v711
      %v713 = vextract.high.u32 %v711
      %v714 = vmul.u32 %v707, %v698
      %v715 = vadd.s32 %v710, %v712
      %vm716 = vc.u32 %v710, %v712
      %v717 = vadd.s32 %v713, 1
      %v718 = vsel %vm716, %v717, %v713
      %v719 = vadd.s32 %v714, %v718
      %v720 = vadd.s32 %v719, 536870912
      %v721 = vshrl.u32 %v720, 30
      %v722 = vshll.u32 %v721, 30
      %v723 = vsub.s32 %v719, %v722
      %vm724 = vcmp.lt.s32.totalorder %v723, 0
      %v725 = vsub.s32 0, %v723
      %v726 = vsel %vm724, %v725, %v723
      %v727 = vclz %v726
      %v728 = vsub.s32 %v727, 2
      %vm729 = vcmp.gt.s32.totalorder 0, %v728
      %v730 = vsel %vm729, 0, %v728
      %v731 = vsub.s32 32, %v730
      %v732 = vshll.u32 %v723, %v730
      %v733 = vshrl.u32 %v715, %v731
      %v734 = vor.u32 %v732, %v733
      %v735 = vsub.s32 4294967266, %v730
      %v736 = vadd.s32 %v735, 127
      %v737 = vshll.u32 %v736, 23
      %v738 = vor.u32 4788187, %v737
      %v739 = vand.u32 2147483647, %v738
      %v741 = vcvt.s32.f32 %v734
      %v742 = vmul.f32 %v741, %v739
      %v743 = vxor.u32 %v742, 2147483648
      %v744 = vsel %vm661, %v743, %v742
      %v745 = vsub.s32 4, %v721
      %v746 = vsel %vm661, %v745, %v721
      %v747 = vsel %vm660, %v550, %v744
      %v748 = vsel %vm660, 0, %v746
      %v749 = vcosq.f32.pop %v747
      %v750 = vsinq.f32.pop %v747
      %vm751 = vweird.f32 %v550
      %v752 = vand.u32 %v748, 3
      %vm753 = vcmp.lt.s32.totalorder %v752, 2
      %vm754 = vcmp.eq.s32.totalorder %v752, 0
      %v755 = vxor.u32 %v750, 2147483648
      %v756 = vsel %vm754, %v749, %v755
      %vm757 = vcmp.eq.s32.totalorder %v752, 2
      %v758 = vxor.u32 %v749, 2147483648
      %v759 = vsel %vm757, %v758, %v750
      %v760 = vsel %vm753, %v756, %v759
      %v761 = vsel %vm751, nan, %v760
      %v764 = vrot.slane %v658, 1
      %v765 = vrot.slane %v761, 1
      %v768 = vmul.f32 %v553, %v764
      %v769 = vmul.f32 %v555, %v765
      %v770 = vand.u32 2147483647, %v548
      %vm771 = vcmp.le.f32.partialorder %v770, 0.7853982
      %vm772 = vcmp.lt.s32.totalorder %v548, 0
      %v773 = vand.u32 %v548, 2139095040
      %v774 = vshrl.u32 %v773, 23
      %v775 = vsub.s32 %v774, 127
      %v776 = vand.u32 2147483647, %v548
      %v777 = vand.u32 %v776, 8388607
      %v778 = vor.u32 %v777, 8388608
      %v779 = vsub.s32 0, %v778
      %v780 = vadd.s32 %v775, 1
      %vm781 = vcmp.gt.s32.totalorder %v780, 0
      %v782 = vsel %vm781, %v780, 0
      %v783 = vshrl.u32 %v782, 5
      %v784 = vand.u32 %v782, 31
      %v785 = vsub.s32 32, %v784
      %v786 = vshrl.u32 683565275, %v785
      %v787 = vshll.u32 683565275, %v784
      %v788 = vshrl.u32 2475754826, %v785
      %v789 = vor.u32 %v787, %v788
      %v790 = vshll.u32 2475754826, %v784
      %v791 = vshrl.u32 2131351028, %v785
      %v792 = vor.u32 %v790, %v791
      %v793 = vshll.u32 2131351028, %v784
      %v794 = vshrl.u32 2102212464, %v785
      %v795 = vor.u32 %v793, %v794
      %v796 = vshll.u32 2102212464, %v784
      %v797 = vshrl.u32 920167782, %v785
      %v798 = vor.u32 %v796, %v797
      %v799 = vshll.u32 920167782, %v784
      %v800 = vshrl.u32 1326507024, %v785
      %v801 = vor.u32 %v799, %v800
      %vm802 = vcmp.lt.s32.totalorder %v783, 1
      %vm803 = vcmp.lt.s32.totalorder %v783, 2
      %vm804 = vcmp.lt.s32.totalorder %v783, 3
      %vm805 = vcmp.lt.s32.totalorder %v783, 4
      %v806 = vsel %vm802, %v786, %v789
      %v807 = vsel %vm805, %v795, 2102212464
      %v808 = vsel %vm804, %v792, %v807
      %v809 = vsel %vm803, %v806, %v808
      %v810 = vsel %vm802, %v789, %v792
      %v811 = vsel %vm805, %v798, 920167782
      %v812 = vsel %vm804, %v795, %v811
      %v813 = vsel %vm803, %v810, %v812
      %v814 = vsel %vm802, %v792, %v795
      %v815 = vsel %vm805, %v801, 1326507024
      %v816 = vsel %vm804, %v798, %v815
      %v817 = vsel %vm803, %v814, %v816
      %v818 = vshll.u32 %v778, 8
      %v819 = vmul.u32.u64.compose %v818, %v817
      %v820 = vextract.low.u32 %v819
      %v821 = vextract.high.u32 %v819
      %v822 = vmul.u32.u64.compose %v818, %v813
      %v823 = vextract.low.u32 %v822
      %v824 = vextract.high.u32 %v822
      %v825 = vmul.u32 %v818, %v809
      %v826 = vadd.s32 %v821, %v823
      %vm827 = vc.u32 %v821, %v823
      %v828 = vadd.s32 %v824, 1
      %v829 = vsel %vm827, %v828, %v824
      %v830 = vadd.s32 %v825, %v829
      %v831 = vadd.s32 %v830, 536870912
      %v832 = vshrl.u32 %v831, 30
      %v833 = vshll.u32 %v832, 30
      %v834 = vsub.s32 %v830, %v833
      %vm835 = vcmp.lt.s32.totalorder %v834, 0
      %v836 = vsub.s32 0, %v834
      %v837 = vsel %vm835, %v836, %v834
      %v838 = vclz %v837
      %v839 = vsub.s32 %v838, 2
      %vm840 = vcmp.gt.s32.totalorder 0, %v839
      %v841 = vsel %vm840, 0, %v839
      %v842 = vsub.s32 32, %v841
      %v843 = vshll.u32 %v834, %v841
      %v844 = vshrl.u32 %v826, %v842
      %v845 = vor.u32 %v843, %v844
      %v846 = vsub.s32 4294967266, %v841
      %v847 = vadd.s32 %v846, 127
      %v848 = vshll.u32 %v847, 23
      %v849 = vor.u32 4788187, %v848
      %v850 = vand.u32 2147483647, %v849
      %v852 = vcvt.s32.f32 %v845
      %v853 = vmul.f32 %v852, %v850
      %v854 = vxor.u32 %v853, 2147483648
      %v855 = vsel %vm772, %v854, %v853
      %v856 = vsub.s32 4, %v832
      %v857 = vsel %vm772, %v856, %v832
      %v858 = vsel %vm771, %v548, %v855
      %v859 = vsel %vm771, 0, %v857
      %v860 = vcosq.f32.pop %v858
      %v861 = vsinq.f32.pop %v858
      %vm862 = vweird.f32 %v548
      %v863 = vadd.s32 %v859, 3
      %v864 = vand.u32 %v863, 3
      %vm865 = vcmp.lt.s32.totalorder %v864, 2
      %vm866 = vcmp.eq.s32.totalorder %v864, 0
      %v867 = vxor.u32 %v861, 2147483648
      %v868 = vsel %vm866, %v860, %v867
      %vm869 = vcmp.eq.s32.totalorder %v864, 2
      %v870 = vxor.u32 %v860, 2147483648
      %v871 = vsel %vm869, %v870, %v861
      %v872 = vsel %vm865, %v868, %v871
      %v873 = vsel %vm862, nan, %v872
      %v874 = vand.u32 2147483647, %v550
      %vm875 = vcmp.le.f32.partialorder %v874, 0.7853982
      %vm876 = vcmp.lt.s32.totalorder %v550, 0
      %v877 = vand.u32 %v550, 2139095040
      %v878 = vshrl.u32 %v877, 23
      %v879 = vsub.s32 %v878, 127
      %v880 = vand.u32 2147483647, %v550
      %v881 = vand.u32 %v880, 8388607
      %v882 = vor.u32 %v881, 8388608
      %v883 = vsub.s32 0, %v882
      %v884 = vadd.s32 %v879, 1
      %vm885 = vcmp.gt.s32.totalorder %v884, 0
      %v886 = vsel %vm885, %v884, 0
      %v887 = vshrl.u32 %v886, 5
      %v888 = vand.u32 %v886, 31
      %v889 = vsub.s32 32, %v888
      %v890 = vshrl.u32 683565275, %v889
      %v891 = vshll.u32 683565275, %v888
      %v892 = vshrl.u32 2475754826, %v889
      %v893 = vor.u32 %v891, %v892
      %v894 = vshll.u32 2475754826, %v888
      %v895 = vshrl.u32 2131351028, %v889
      %v896 = vor.u32 %v894, %v895
      %v897 = vshll.u32 2131351028, %v888
      %v898 = vshrl.u32 2102212464, %v889
      %v899 = vor.u32 %v897, %v898
      %v900 = vshll.u32 2102212464, %v888
      %v901 = vshrl.u32 920167782, %v889
      %v902 = vor.u32 %v900, %v901
      %v903 = vshll.u32 920167782, %v888
      %v904 = vshrl.u32 1326507024, %v889
      %v905 = vor.u32 %v903, %v904
      %vm906 = vcmp.lt.s32.totalorder %v887, 1
      %vm907 = vcmp.lt.s32.totalorder %v887, 2
      %vm908 = vcmp.lt.s32.totalorder %v887, 3
      %vm909 = vcmp.lt.s32.totalorder %v887, 4
      %v910 = vsel %vm906, %v890, %v893
      %v911 = vsel %vm909, %v899, 2102212464
      %v912 = vsel %vm908, %v896, %v911
      %v913 = vsel %vm907, %v910, %v912
      %v914 = vsel %vm906, %v893, %v896
      %v915 = vsel %vm909, %v902, 920167782
      %v916 = vsel %vm908, %v899, %v915
      %v917 = vsel %vm907, %v914, %v916
      %v918 = vsel %vm906, %v896, %v899
      %v919 = vsel %vm909, %v905, 1326507024
      %v920 = vsel %vm908, %v902, %v919
      %v921 = vsel %vm907, %v918, %v920
      %v922 = vshll.u32 %v882, 8
      %v923 = vmul.u32.u64.compose %v922, %v921
      %v924 = vextract.low.u32 %v923
      %v925 = vextract.high.u32 %v923
      %v926 = vmul.u32.u64.compose %v922, %v917
      %v927 = vextract.low.u32 %v926
      %v928 = vextract.high.u32 %v926
      %v929 = vmul.u32 %v922, %v913
      %v930 = vadd.s32 %v925, %v927
      %vm931 = vc.u32 %v925, %v927
      %v932 = vadd.s32 %v928, 1
      %v933 = vsel %vm931, %v932, %v928
      %v934 = vadd.s32 %v929, %v933
      %v935 = vadd.s32 %v934, 536870912
      %v936 = vshrl.u32 %v935, 30
      %v937 = vshll.u32 %v936, 30
      %v938 = vsub.s32 %v934, %v937
      %vm939 = vcmp.lt.s32.totalorder %v938, 0
      %v940 = vsub.s32 0, %v938
      %v941 = vsel %vm939, %v940, %v938
      %v942 = vclz %v941
      %v943 = vsub.s32 %v942, 2
      %vm944 = vcmp.gt.s32.totalorder 0, %v943
      %v945 = vsel %vm944, 0, %v943
      %v946 = vsub.s32 32, %v945
      %v947 = vshll.u32 %v938, %v945
      %v948 = vshrl.u32 %v930, %v946
      %v949 = vor.u32 %v947, %v948
      %v950 = vsub.s32 4294967266, %v945
      %v951 = vadd.s32 %v950, 127
      %v952 = vshll.u32 %v951, 23
      %v953 = vor.u32 4788187, %v952
      %v954 = vand.u32 2147483647, %v953
      %v956 = vcvt.s32.f32 %v949
      %v957 = vmul.f32 %v956, %v954
      %v958 = vxor.u32 %v957, 2147483648
      %v959 = vsel %vm876, %v958, %v957
      %v960 = vsub.s32 4, %v936
      %v961 = vsel %vm876, %v960, %v936
      %v962 = vsel %vm875, %v550, %v959
      %v963 = vsel %vm875, 0, %v961
      %v964 = vcosq.f32.pop %v962
      %v965 = vsinq.f32.pop %v962
      %vm966 = vweird.f32 %v550
      %v967 = vadd.s32 %v963, 3
      %v968 = vand.u32 %v967, 3
      %vm969 = vcmp.lt.s32.totalorder %v968, 2
      %vm970 = vcmp.eq.s32.totalorder %v968, 0
      %v971 = vxor.u32 %v965, 2147483648
      %v972 = vsel %vm970, %v964, %v971
      %vm973 = vcmp.eq.s32.totalorder %v968, 2
      %v974 = vxor.u32 %v964, 2147483648
      %v975 = vsel %vm973, %v974, %v965
      %v976 = vsel %vm969, %v972, %v975
      %v977 = vsel %vm966, nan, %v976
      %v980 = vrot.slane %v873, 1
      %v981 = vrot.slane %v977, 1
      %v984 = vmul.f32 %v553, %v980
      %v985 = vmul.f32 %v555, %v981
      %v986 = vmul.f32 %v768, %v768
      %v987 = vmul.f32 %v769, %v769
      %v988 = vmul.f32 %v984, %v984
      %v989 = vmul.f32 %v985, %v985
      %v990 = vadd.f32 %v986, %v988
      %v991 = vadd.f32 %v987, %v989
      %v992 = vrcp.pop %v990
      %v993 = vmul.f32 %v990, %v992
      %v994 = vrcp.pop %v991
      %v995 = vmul.f32 %v991, %v994
      %v996 = vmul.f32 %v984, %v768
      %v997 = vmul.f32 %v985, %v769
      %v998 = vsub.f32 %v996, %v996
      %v999 = vsub.f32 %v997, %v997
      %v1000 = vmul.f32 %v998, %v992
      %v1001 = vmul.f32 %v999, %v994
      %v1002 = vld [vmem:[%s317] sm:$0xff]
      %v1003 = vld [vmem:[%s317 + $0x8] sm:$0xff]
      %v1004 = vld [vmem:[%s317 + $0x10] sm:$0xff]
      %v1005 = vld [vmem:[%s317 + $0x18] sm:$0xff]
      %1007 = vset.pattern.permute.xlu0 0
      %1008 = vperm.xlu0 %1007, %v1002
      %v1009 = vpop.permute.xlu0 %1008
      %1012 = vset.pattern.permute.xlu0 0
      %1013 = vperm.xlu0 %1012, %v1003
      %v1014 = vpop.permute.xlu0 %1013
      %1017 = vset.pattern.permute.xlu0 0
      %1018 = vperm.xlu0 %1017, %v1004
      %v1019 = vpop.permute.xlu0 %1018
      %1022 = vset.pattern.permute.xlu0 0
      %1023 = vperm.xlu0 %1022, %v1005
      %v1024 = vpop.permute.xlu0 %1023
      %v1026 = vlaneseq
      %v1027 = vshrl.u32 %v1026, 7
      %v1028 = vsub.s32 0, %v1027
      %v1029 = vrot.slane %v993, %v1028
      %v1030 = vlaneseq
      %v1031 = vshrl.u32 %v1030, 7
      %v1032 = vsub.s32 0, %v1031
      %v1033 = vrot.slane %v995, %v1032
      %v1034 = vmul.f32 %v1009, %v1029
      %v1035 = vmul.f32 %v1009, %v1033
      %v1036 = vmul.f32 %v1014, %v1029
      %v1037 = vmul.f32 %v1014, %v1033
      %v1038 = vmul.f32 %v1019, %v1029
      %v1039 = vmul.f32 %v1019, %v1033
      %v1040 = vmul.f32 %v1024, %v1029
      %v1041 = vmul.f32 %v1024, %v1033
      %v1042 = vlaneseq
      %v1043 = vshrl.u32 %v1042, 7
      %v1044 = vsub.s32 0, %v1043
      %v1045 = vrot.slane %v1000, %v1044
      %v1046 = vlaneseq
      %v1047 = vshrl.u32 %v1046, 7
      %v1048 = vsub.s32 0, %v1047
      %v1049 = vrot.slane %v1001, %v1048
      %v1050 = vmul.f32 %v1009, %v1045
      %v1051 = vmul.f32 %v1009, %v1049
      %v1052 = vmul.f32 %v1014, %v1045
      %v1053 = vmul.f32 %v1014, %v1049
      %v1054 = vmul.f32 %v1019, %v1045
      %v1055 = vmul.f32 %v1019, %v1049
      %v1056 = vmul.f32 %v1024, %v1045
      %v1057 = vmul.f32 %v1024, %v1049
      %v1058 = vld [vmem:[%s4] sm:$0xff]
      %v1059 = vld [vmem:[%s5] sm:$0xff]
      %1061 = vset.pattern.permute.xlu0 0
      %1062 = vperm.xlu0 %1061, %v1059
      %v1063 = vpop.permute.xlu0 %1062
      %v1066 = vsel %vm477, %v1058, 0
      %1068 = vmatprep.subr.mxu0 %v1035
      %1069 = vmatpush1.msra.mxu0 %v1034
      %1070 = vmatprep.subr.mxu0 %v1037
      %1071 = vmatpush1.msra.mxu0 %v1036
      %1072 = vmatprep.subr.mxu0 %v1039
      %1073 = vmatpush1.msra.mxu0 %v1038
      %1074 = vmatprep.subr.mxu0 %v1041
      %1075 = vmatpush1.msra.mxu0 %v1040
      %1076 = vmatprep.subr.mxu0 %v1051
      %1077 = vmatpush1.msra.mxu0 %v1050
      %1078 = vmatprep.subr.mxu0 %v1053
      %1079 = vmatpush1.msra.mxu0 %v1052
      %1080 = vmatprep.subr.mxu0 %v1055
      %1081 = vmatpush1.msra.mxu0 %v1054
      %1082 = vmatprep.subr.mxu0 %v1057
      %1083 = vmatpush1.msra.mxu0 %v1056
      %1084 = vmatprep.subr.mxu0 0.0
      %1085 = vmatpush1.msra.mxu0 0.0
      %1086 = vmatprep.subr.mxu0 0.0
      %1087 = vmatpush1.msra.mxu0 0.0
      %1088 = vmatprep.subr.mxu0 0.0
      %1089 = vmatpush1.msra.mxu0 0.0
      %1090 = vmatprep.subr.mxu0 0.0
      %1091 = vmatpush1.msra.mxu0 0.0
      %1092 = vmatprep.subr.mxu0 0.0
      %1093 = vmatpush1.msra.mxu0 0.0
      %1094 = vmatprep.subr.mxu0 0.0
      %1095 = vmatpush1.msra.mxu0 0.0
      %1096 = vmatprep.subr.mxu0 0.0
      %1097 = vmatpush1.msra.mxu0 0.0
      %1098 = vmatprep.subr.mxu0 0.0
      %1099 = vmatpush1.msra.mxu0 0.0
      %1100 = vmatprep.subr.mxu0 0.0
      %1101 = vmatpush1.msra.mxu0 0.0
      %1102 = vmatprep.subr.mxu0 0.0
      %1103 = vmatpush1.msra.mxu0 0.0
      %1104 = vmatprep.subr.mxu0 0.0
      %1105 = vmatpush1.msra.mxu0 0.0
      %1106 = vmatprep.subr.mxu0 0.0
      %1107 = vmatpush1.msra.mxu0 0.0
      %1108 = vmatprep.subr.mxu0 0.0
      %1109 = vmatpush1.msra.mxu0 0.0
      %1110 = vmatprep.subr.mxu0 0.0
      %1111 = vmatpush1.msra.mxu0 0.0
      %1112 = vmatprep.subr.mxu0 0.0
      %1113 = vmatpush1.msra.mxu0 0.0
      %1114 = vmatprep.subr.mxu0 0.0
      %1115 = vmatpush1.msra.mxu0 0.0
      %1116 = vmatprep.subr.mxu0 0.0
      %1117 = vmatpush1.msra.mxu0 0.0
      %1118 = vmatprep.subr.mxu0 0.0
      %1119 = vmatpush1.msra.mxu0 0.0
      %1120 = vmatprep.subr.mxu0 0.0
      %1121 = vmatpush1.msra.mxu0 0.0
      %1122 = vmatprep.subr.mxu0 0.0
      %1123 = vmatpush1.msra.mxu0 0.0
      %1124 = vmatprep.subr.mxu0 0.0
      %1125 = vmatpush1.msra.mxu0 0.0
      %1126 = vmatprep.subr.mxu0 0.0
      %1127 = vmatpush1.msra.mxu0 0.0
      %1128 = vmatprep.subr.mxu0 0.0
      %1129 = vmatpush1.msra.mxu0 0.0
      %1130 = vmatprep.subr.mxu0 0.0
      %1131 = vmatpush1.msra.mxu0 0.0
      %1132 = vmatprep.mubr.f32.mxu0 0.0
      %1133 = vmatmul.mubr.f32.gmra.mrb[0].mxu0 %v1066
      %v1134 = vpop.f32.mrb[0].mxu0
      %v1135 = vadd.f32 %v1063, %v1134
      %v1136 = vpop.f32.mrb[0].mxu0
      %v1137 = vadd.f32 %v1063, %v1136
      %1138 = vdwg.mxu0
      %1139 = vst [vmem:[%s326] sm:$0xff] %v1135
      %1140 = vst [vmem:[%s326 + $0x8] sm:$0xff] %v1137
      %s1141 = smul.u32 2, %s22
      %p1142 = scmp.lt.s32.totalorder %s21, 1
      %s1143 = scalar_select %p1142, %s21, 1
      %p1144 = scmp.lt.s32.totalorder %s1141, 1
      %s1145 = scalar_select %p1144, %s1141, 1
      %s1146 = smul.addr %s1143, 2
      %s1147 = sadd.s32 %s1145, %s1146
      %s1148 = smul.addr %s1147, 8
      %s1149 = scalar_lea.vmem %s6, %s1148
      // Predicated region
      $region45: #{run.1} parent=43 // pred_check
        %p1150 = pneg %p192
      $region46: #{run.1} parent=43 // pred_check_branch
        %1152 = sbr.rel (%p1150) target = $region48
      $region47: #{run.1} parent=43 // pred_region
        %s1153 = smul.u32 2, %s22
      $region48: #{run.1} parent=43 // pred_fallthru
        _
    $region44: #{run.1} parent=5 // pred_fallthru
      _
    %p1154 = scmp.le.s32.totalorder 2, %s12
    // Predicated region
    $region49: #{run.1} parent=5 // pred_check
      %p1155 = pneg %p1154
    $region50: #{run.1} parent=5 // pred_check_branch
      %1157 = sbr.rel (%p1155) target = $region52
    $region51: #{run.1} parent=5 // pred_region
      %s1158 = ssub.s32 %s12, 2
      // Predicated region
      $region53: #{run.1} parent=51 // pred_check
        %p1159 = pneg %p198
      $region54: #{run.1} parent=51 // pred_check_branch
        %1161 = sbr.rel (%p1159) target = $region56
      $region55: #{run.1} parent=51 // pred_region
        %s1162 = smul.u32 2, %s24
        %p1163 = scmp.lt.s32.totalorder %s23, 1
        %s1164 = scalar_select %p1163, %s23, 1
        %p1165 = scmp.lt.s32.totalorder %s1162, 1
        %s1166 = scalar_select %p1165, %s1162, 1
        %s1167 = smul.addr %s1164, 2
        %s1168 = sadd.s32 %s1166, %s1167
        %s1169 = smul.addr %s1168, 8
        %s1170 = scalar_lea.vmem %s6, %s1169
      $region56: #{run.1} parent=51 // pred_fallthru
        _
    $region52: #{run.1} parent=5 // pred_fallthru
      _
  $region6: #{run.1} parent=0 // loop_footer
    %s16 = sadd.s32 1, %s12
  $region7: #{run.1} parent=0 // loop_footer_branch
    %11 = sbr.rel target = $region3
  $region8: #{run.1} parent=0 // loop_exit
    _

</llo_original>
